<compile_context>
chip_gen: v5e
topology: v5e:2x2
jax: 0.10.0
libtpu: 0.0.40
codegen_flags: <defaults>
</compile_context>

<pallas_src>
import functools

import jax
import jax.numpy as jnp
from jax.experimental import pallas as pl
from jax.experimental.pallas import tpu as pltpu


def _llama_mlp_kernel(x_ref, wgu_ref, wd_ref, o_ref, acc_ref, *, block_n):
    """One (row-tile i, intermediate-slab n) grid step."""
    n = pl.program_id(1)

    @pl.when(n == 0)
    def _():
        acc_ref[...] = jnp.zeros_like(acc_ref)

    x = x_ref[...]
    # Fused gate+up projection: a single MXU matmul over the interleaved
    # [gate | up] slab of this intermediate chunk.
    gu = jnp.dot(x, wgu_ref[...], preferred_element_type=jnp.float32)
    g = gu[:, :block_n]          # lane slice at a multiple of 128 -> free
    u = gu[:, block_n:]
    # SiLU(g) * u — sigmoid lands on the EUP, multiplies on the VPU.
    h = (g * jax.nn.sigmoid(g)) * u
    # Partial down projection for this slab, accumulated in f32 scratch.
    # h is cast to the weight dtype (bf16 in the production path), matching
    # bf16 model numerics; accumulation stays f32.
    acc_ref[...] += jnp.dot(h.astype(wd_ref.dtype), wd_ref[...],
                            preferred_element_type=jnp.float32)

    @pl.when(n == pl.num_programs(1) - 1)
    def _():
        o_ref[...] = acc_ref[...].astype(o_ref.dtype)


def _round_up(x, m):
    return ((x + m - 1) // m) * m


def _vmem_limit_bytes():
    """Generation-aware scoped-VMEM limit: ~85% of physical, minus headroom.
    ~102 MiB on v5e/v6e (128 MiB physical), ~52 MiB on v7x (64 MiB physical)."""
    try:
        cap = pltpu.get_tpu_info().vmem_capacity_bytes
    except Exception:
        cap = 64 * 1024 * 1024          # conservative fallback (v7x-sized)
    return min(int(cap * 0.85), cap - 12 * 1024 * 1024)


def _fit_tiles(bm, bn, embed, x_bytes, w_bytes, out_bytes, budget):
    """Shrink (bm, bn) until the pipelined footprint fits `budget`.

    Shrink order follows the per-generation guidance: keep bm large (it is the
    weight-refetch amortization lever) down to 512; shrink bn down to 256
    first; only then go smaller."""
    def footprint(bm_, bn_):
        buffers = (2 * bm_ * embed * x_bytes           # x tile (double-buffered)
                   + 2 * embed * (2 * bn_) * w_bytes   # fused [gate|up] slab
                   + 2 * bn_ * embed * w_bytes         # down slab
                   + 2 * bm_ * embed * out_bytes       # output tile
                   + bm_ * embed * 4)                  # f32 accumulator scratch
        temps = bm_ * embed * 4 + 3 * bm_ * bn_ * 4    # down-dot result + gu/h
        return buffers + temps

    while footprint(bm, bn) > budget:
        if bn > 256:
            bn = max(256, _round_up(bn // 2, 128))
        elif bm > 512:
            bm = max(512, _round_up(bm // 2, 128))
        elif bn > 128:
            bn = 128
        elif bm > 16:
            bm = max(16, _round_up(bm // 2, 16))
        else:
            break
    return bm, bn


def llama_mlp(x, w_gate, w_up, w_down, *, block_m=1024, block_n=1024,
              compute_dtype=None):
    """Fused LlamaMLP forward.

    x            : (..., embed)
    w_gate, w_up : (embed, inter)   -- transpose of the nn.Linear parameters
    w_down       : (inter, embed)
    compute_dtype: optional dtype (e.g. jnp.bfloat16) for the matmul operands;
                   accumulation stays f32, output dtype matches x.dtype.
    """
    orig_shape = x.shape
    out_dtype = x.dtype
    embed = orig_shape[-1]
    inter = w_gate.shape[1]
    assert w_gate.shape == (embed, inter)
    assert w_up.shape == (embed, inter)
    assert w_down.shape == (inter, embed)

    if compute_dtype is not None:
        x = x.astype(compute_dtype)
        w_gate = w_gate.astype(compute_dtype)
        w_up = w_up.astype(compute_dtype)
        w_down = w_down.astype(compute_dtype)

    x2d = x.reshape(-1, embed)
    m = x2d.shape[0]

    # ---- tile selection ---------------------------------------------------
    # Row tile: MXU-aligned (128/256) for prefill-sized M, sublane/packing
    # aligned (16) for decode-sized M.  Intermediate slab: lane-aligned (128).
    bm = min(block_m, m)
    bm = _round_up(bm, 128) if bm >= 128 else _round_up(bm, 16)
    bn = min(_round_up(block_n, 128), _round_up(inter, 128))

    vmem_limit = _vmem_limit_bytes()
    x_bytes = x2d.dtype.itemsize
    w_bytes = w_gate.dtype.itemsize
    out_bytes = jnp.dtype(out_dtype).itemsize
    bm, bn = _fit_tiles(bm, bn, embed, x_bytes, w_bytes, out_bytes,
                        budget=int(vmem_limit * 0.92))

    m_p = _round_up(m, bm)
    inter_p = _round_up(inter, bn)

    # ---- zero padding (padded rows/columns contribute exactly zero) --------
    if m_p != m:
        x2d = jnp.pad(x2d, ((0, m_p - m), (0, 0)))
    if inter_p != inter:
        pad = inter_p - inter
        w_gate = jnp.pad(w_gate, ((0, 0), (0, pad)))
        w_up = jnp.pad(w_up, ((0, 0), (0, pad)))
        w_down = jnp.pad(w_down, ((0, pad), (0, 0)))

    # ---- fuse gate/up into one slab-interleaved weight ----------------------
    # Slab k of wgu is [gate slab k | up slab k] (embed, 2*bn): one BlockSpec
    # and one matmul per step cover both projections.  (For repeated calls,
    # pre-fuse once outside and pass through — this copy is per-call here.)
    n_slabs = inter_p // bn
    wgu = jnp.concatenate(
        [w_gate.reshape(embed, n_slabs, bn),
         w_up.reshape(embed, n_slabs, bn)], axis=2,
    ).reshape(embed, 2 * inter_p)

    grid = (m_p // bm, n_slabs)

    # Advisory cost estimate for XLA's scheduler: 3 matmuls (6*M*E*I flops),
    # one sigmoid per intermediate element, weights re-streamed per row tile.
    cost = pl.CostEstimate(
        flops=6 * m_p * embed * inter_p,
        transcendentals=m_p * inter_p,
        bytes_accessed=int(m_p * embed * (x_bytes + out_bytes)
                           + grid[0] * 3 * embed * inter_p * w_bytes),
    )

    out = pl.pallas_call(
        functools.partial(_llama_mlp_kernel, block_n=bn),
        out_shape=jax.ShapeDtypeStruct((m_p, embed), out_dtype),
        grid_spec=pltpu.PrefetchScalarGridSpec(
            num_scalar_prefetch=0,
            grid=grid,
            in_specs=[
                pl.BlockSpec((bm, embed), lambda i, n: (i, 0)),       # x rows
                pl.BlockSpec((embed, 2 * bn), lambda i, n: (0, n)),   # [gate|up]
                pl.BlockSpec((bn, embed), lambda i, n: (n, 0)),       # down slab
            ],
            out_specs=pl.BlockSpec((bm, embed), lambda i, n: (i, 0)),
            scratch_shapes=[pltpu.VMEM((bm, embed), jnp.float32)],
        ),
        compiler_params=pltpu.CompilerParams(
            # Row tiles are independent (megacore / dual-TC shardable); the
            # intermediate axis is the down-projection reduction.
            dimension_semantics=("parallel", "arbitrary"),
            vmem_limit_bytes=vmem_limit,
        ),
        cost_estimate=cost,
    )(x2d, wgu, w_down)

    if m_p != m:
        out = out[:m]
    return out.reshape(orig_shape).astype(out_dtype)


if __name__ == "__main__":
    key = jax.random.PRNGKey(0)
    k_x, k_g, k_u, k_d = jax.random.split(key, 4)

    # Small shapes consistent with the module layout.  24 tokens (not a
    # multiple of 16) exercises the row-padding path.
    batch, seq = 2, 12
    embed_dim, intermediate_dim = 256, 384
    dtype = jnp.float32

    x = jax.random.normal(k_x, (batch, seq, embed_dim), dtype=dtype)
    # nn.Linear-like scale (~1/sqrt(fan_in)); weights in "math" (in, out) layout.
    w_gate = jax.random.normal(k_g, (embed_dim, intermediate_dim), dtype=dtype) \
        * (embed_dim ** -0.5)
    w_up = jax.random.normal(k_u, (embed_dim, intermediate_dim), dtype=dtype) \
        * (embed_dim ** -0.5)
    w_down = jax.random.normal(k_d, (intermediate_dim, embed_dim), dtype=dtype) \
        * (intermediate_dim ** -0.5)

    # Plain-JAX reference (same math as the PyTorch module forward).
    x2 = x.reshape(-1, embed_dim)
    ref = ((jax.nn.silu(x2 @ w_gate) * (x2 @ w_up)) @ w_down).reshape(x.shape)

    # 1) Small explicit tiles: 2 row tiles (with padding) x 3 reduction steps.
    out_small = llama_mlp(x, w_gate, w_up, w_down, block_m=8, block_n=128)
    jax.block_until_ready(out_small)
    assert out_small.shape == x.shape and out_small.dtype == x.dtype
    err = float(jnp.max(jnp.abs(out_small - ref)))
    assert jnp.allclose(out_small, ref, atol=2e-2, rtol=2e-2), f"max abs err = {err}"

    # 2) Default (auto, VMEM-budget-aware) tiling.
    out_auto = llama_mlp(x, w_gate, w_up, w_down)
    jax.block_until_ready(out_auto)
    err = float(jnp.max(jnp.abs(out_auto - ref)))
    assert jnp.allclose(out_auto, ref, atol=2e-2, rtol=2e-2), f"max abs err = {err}"

    # 3) bf16 fast path (production path: bf16 operands, f32 accumulation).
    out_bf16 = llama_mlp(x, w_gate, w_up, w_down, compute_dtype=jnp.bfloat16)
    jax.block_until_ready(out_bf16)
    assert out_bf16.shape == x.shape and out_bf16.dtype == x.dtype
    err = float(jnp.max(jnp.abs(out_bf16 - ref)))
    assert jnp.allclose(out_bf16, ref, atol=1.5e-1, rtol=1.5e-1), f"max abs err = {err}"

    print("KERNEL_OK")
</pallas_src>

<mosaic_0001>
module attributes {stable_mosaic.version = 11 : i64} {
  func.func @_llama_mlp_kernel(%arg0: i32, %arg1: i32, %arg2: memref<16x256xf32, #tpu.memory_space<vmem>>, %arg3: memref<256x256xf32, #tpu.memory_space<vmem>>, %arg4: memref<128x256xf32, #tpu.memory_space<vmem>>, %arg5: memref<16x256xf32, #tpu.memory_space<vmem>>, %arg6: memref<16x256xf32, #tpu.memory_space<vmem>>) attributes {dimension_semantics = [#tpu.dimension_semantics<parallel>, #tpu.dimension_semantics<arbitrary>], iteration_bounds = array<i64: 2, 3>, scalar_prefetch = 0 : i64, scratch_operands = 1 : i64, tpu.core_type = #tpu.core_type<tc>, window_params = [{transform_indices = @transform_0, window_bounds = array<i64: 16, 256>}, {transform_indices = @transform_1, window_bounds = array<i64: 256, 256>}, {transform_indices = @transform_2, window_bounds = array<i64: 128, 256>}, {transform_indices = @transform_3, window_bounds = array<i64: 16, 256>}]} {
    %c0_i32 = arith.constant 0 : i32
    %0 = arith.cmpi eq, %arg1, %c0_i32 : i32
    %1 = arith.extui %0 : i1 to i32
    %c0_i32_0 = arith.constant 0 : i32
    %2 = arith.cmpi ne, %1, %c0_i32_0 : i32
    scf.if %2 {
      %cst_13 = arith.constant 0.000000e+00 : f32
      %23 = vector.broadcast %cst_13 : f32 to vector<16x256xf32>
      %c0_14 = arith.constant 0 : index
      %c0_15 = arith.constant 0 : index
      %24 = vector.load %arg6[%c0_14, %c0_15] : memref<16x256xf32, #tpu.memory_space<vmem>>, vector<16x256xf32>
      tpu.vector_store %arg6[%c0_14, %c0_15], %23 {strides = array<i32>} : memref<16x256xf32, #tpu.memory_space<vmem>>, vector<16x256xf32>,
    } else {
    }
    %c0 = arith.constant 0 : index
    %c0_1 = arith.constant 0 : index
    %3 = vector.load %arg2[%c0, %c0_1] : memref<16x256xf32, #tpu.memory_space<vmem>>, vector<16x256xf32>
    %c0_2 = arith.constant 0 : index
    %c0_3 = arith.constant 0 : index
    %4 = vector.load %arg3[%c0_2, %c0_3] : memref<256x256xf32, #tpu.memory_space<vmem>>, vector<256x256xf32>
    %cst = arith.constant dense<0.000000e+00> : vector<16x256xf32>
    %5 = tpu.matmul %3, %4, %cst {dimension_numbers = #tpu.dot_dimension_numbers<[1], [0], [0], [1], [0, 0, 1, 1], [], []>} : vector<16x256xf32>, vector<256x256xf32>, vector<16x256xf32> -> vector<16x256xf32>
    %6 = vector.extract_strided_slice %5 {offsets = [0, 0], sizes = [16, 128], strides = [1, 1]} : vector<16x256xf32> to vector<16x128xf32>
    %7 = vector.extract_strided_slice %5 {offsets = [0, 128], sizes = [16, 128], strides = [1, 1]} : vector<16x256xf32> to vector<16x128xf32>
    %8 = arith.negf %6 : vector<16x128xf32>
    %9 = math.exp %8 : vector<16x128xf32>
    %cst_4 = arith.constant 1.000000e+00 : f32
    %10 = vector.broadcast %cst_4 : f32 to vector<16x128xf32>
    %11 = arith.addf %10, %9 : vector<16x128xf32>
    %12 = arith.divf %10, %11 : vector<16x128xf32>
    %13 = arith.mulf %6, %12 : vector<16x128xf32>
    %14 = arith.mulf %13, %7 : vector<16x128xf32>
    %c0_5 = arith.constant 0 : index
    %c0_6 = arith.constant 0 : index
    %15 = vector.load %arg6[%c0_5, %c0_6] : memref<16x256xf32, #tpu.memory_space<vmem>>, vector<16x256xf32>
    %c0_7 = arith.constant 0 : index
    %c0_8 = arith.constant 0 : index
    %16 = vector.load %arg4[%c0_7, %c0_8] : memref<128x256xf32, #tpu.memory_space<vmem>>, vector<128x256xf32>
    %cst_9 = arith.constant dense<0.000000e+00> : vector<16x256xf32>
    %17 = tpu.matmul %14, %16, %cst_9 {dimension_numbers = #tpu.dot_dimension_numbers<[1], [0], [0], [1], [0, 0, 1, 1], [], []>} : vector<16x128xf32>, vector<128x256xf32>, vector<16x256xf32> -> vector<16x256xf32>
    %18 = arith.addf %15, %17 : vector<16x256xf32>
    %c0_10 = arith.constant 0 : index
    %c0_11 = arith.constant 0 : index
    %19 = vector.load %arg6[%c0_10, %c0_11] : memref<16x256xf32, #tpu.memory_space<vmem>>, vector<16x256xf32>
    tpu.vector_store %arg6[%c0_10, %c0_11], %18 {strides = array<i32>} : memref<16x256xf32, #tpu.memory_space<vmem>>, vector<16x256xf32>,
    %c2_i32 = arith.constant 2 : i32
    %20 = arith.cmpi eq, %arg1, %c2_i32 : i32
    %21 = arith.extui %20 : i1 to i32
    %c0_i32_12 = arith.constant 0 : i32
    %22 = arith.cmpi ne, %21, %c0_i32_12 : i32
    scf.if %22 {
      %c0_13 = arith.constant 0 : index
      %c0_14 = arith.constant 0 : index
      %23 = vector.load %arg6[%c0_13, %c0_14] : memref<16x256xf32, #tpu.memory_space<vmem>>, vector<16x256xf32>
      %c0_15 = arith.constant 0 : index
      %c0_16 = arith.constant 0 : index
      %24 = vector.load %arg5[%c0_15, %c0_16] : memref<16x256xf32, #tpu.memory_space<vmem>>, vector<16x256xf32>
      tpu.vector_store %arg5[%c0_15, %c0_16], %23 {strides = array<i32>} : memref<16x256xf32, #tpu.memory_space<vmem>>, vector<16x256xf32>,
    } else {
    }
    return
  }
  func.func @transform_0(%arg0: i32, %arg1: i32) -> (i32, i32) {
    %c0_i32 = arith.constant 0 : i32
    %c0_i32_0 = arith.constant 0 : i32
    return %arg0, %c0_i32 : i32, i32
  }
  func.func @transform_1(%arg0: i32, %arg1: i32) -> (i32, i32) {
    %c0_i32 = arith.constant 0 : i32
    %c0_i32_0 = arith.constant 0 : i32
    return %c0_i32, %arg1 : i32, i32
  }
  func.func @transform_2(%arg0: i32, %arg1: i32) -> (i32, i32) {
    %c0_i32 = arith.constant 0 : i32
    %c0_i32_0 = arith.constant 0 : i32
    return %arg1, %c0_i32 : i32, i32
  }
  func.func @transform_3(%arg0: i32, %arg1: i32) -> (i32, i32) {
    %c0_i32 = arith.constant 0 : i32
    %c0_i32_0 = arith.constant 0 : i32
    return %arg0, %c0_i32 : i32, i32
  }
}

</mosaic_0001>

<llo_original>
// kernel: tpu_custom_call.1
$region0: #{tpu_custom_call.1}
  #allocation0 [shape = 'u32[]', space=smem, size = 0x4, offset = 0x4, fixed_abs, tag = 'smem constant byte address 0x4 - core index']
  #allocation1 [shape = 'u32[72,128]{1,0:T(1,128)}', space=vmem, size = 0x9000, scoped, tag = 'internal scratch']
  #allocation2 [shape = 'f32[16,256]{1,0:T(8,128)}', space=vmem, size = 0x4000, scoped, tag = 'scratch operand']
  %s0 = inlined_call_operand.hbm [shape: f32[32,256], index: 0, kind: input, shape index: {}]
  %s1 = inlined_call_operand.hbm [shape: f32[256,768], index: 1, kind: input, shape index: {}]
  %s2 = inlined_call_operand.hbm [shape: f32[384,256], index: 2, kind: input, shape index: {}]
  %s3 = inlined_call_operand.hbm [shape: f32[32,256], index: 3, kind: output, shape index: {}]
  %s4 = sld [smem:[#allocation0]]
  $region65: #{tpu_custom_call.1} parent=0
    _
  %s6 = ssub.s32 1, %s4
  %s7 = scalar_select 0, %s6, %s4
  $region1: #{tpu_custom_call.1} parent=0
    #allocation3 [shape = 'u8[32768]{0}', space=vmem, size = 0x8000, scoped, tag = 'input window, operand 0']
    #allocation4 [shape = 's32[2]{0}', space=sflag, size = 0x8, scoped, tag = 'scoped memory for tpu_custom_call.1']
    #allocation5 [shape = 's32[2]{0}', space=sflag, size = 0x8, scoped, tag = 'scoped memory for tpu_custom_call.1']
    #allocation6 [shape = 'u8[524288]{0}', space=vmem, size = 0x80000, scoped, tag = 'input window, operand 1']
    #allocation7 [shape = 's32[2]{0}', space=sflag, size = 0x8, scoped, tag = 'scoped memory for tpu_custom_call.1']
    #allocation8 [shape = 'u8[262144]{0}', space=vmem, size = 0x40000, scoped, tag = 'input window, operand 2']
    #allocation9 [shape = 'u8[32768]{0}', space=vmem, size = 0x8000, scoped, tag = 'output window, operand 0']
    %8 = vsyncpa [#allocation4], 0
    %s9 = scalar_lea.sflag [#allocation4], 1
    %10 = vsyncpa %s9, 0
    %11 = vsyncpa [#allocation7], 0
    %s12 = scalar_lea.sflag [#allocation7], 1
    %13 = vsyncpa %s12, 0
    %14 = vsyncpa [#allocation5], 0
    %s15 = scalar_lea.sflag [#allocation5], 1
    %16 = vsyncpa %s15, 0
    loop: start=0, step=1, limit=8
    $region2: #{tpu_custom_call.1} parent=1 // loop_pre_header
      _
    $region3: #{tpu_custom_call.1} parent=1 // loop_header
      %s18 = sphi 0, %s22
      %p19 = scmp.ge.s32.totalorder %s18, 8
      %s25 = sphi 0, %s37
      %s26 = sphi 0, %s33
      %s27 = sphi 0, %s25
      %s28 = sphi 0, %s26
      %s29 = sphi 0, %s27
      %s30 = sphi 0, %s28
      %s40 = sphi 0, %s42
      %s43 = sphi 0, %s40
      %s44 = sphi 0, %s43
      %s60 = sphi 0, %s44
      %s66 = sphi 0, %s68
      %s69 = sphi 0, %s66
      %s70 = sphi 0, %s69
      %s86 = sphi 0, %s70
      %s92 = sphi 0, %s94
      %s95 = sphi 0, %s92
      %s96 = sphi 0, %s95
      %s112 = sphi 0, %s96
      %s118 = sphi 0, %s120
      %s121 = sphi 0, %s118
      %s122 = sphi 0, %s121
      %s138 = sphi 0, %s122
    $region4: #{tpu_custom_call.1} parent=1 // loop_header_branch
      %21 = sbr.rel (%p19) target = $region8
    $region5: #{tpu_custom_call.1} parent=1 // loop_body
      %s23 = ssub.s32 %s18, 1
      %s24 = ssub.s32 %s18, 2
      %s31 = sadd.s32 1, %s26
      %p32 = scmp.ge.s32.totalorder %s31, 3
      %s33 = scalar_select %p32, 0, %s31
      %s34 = sadd.s32 1, %s25
      %s35 = scalar_select %p32, %s34, %s25
      %p36 = scmp.ge.s32.totalorder %s35, 2
      %s37 = scalar_select %p36, 0, %s35
      %s38 = ssub.s32 %s25, %s37
      %p39 = scmp.eq.s32.totalorder %s38, 0
      %s41 = sadd.s32 %s40, 1
      %s42 = scalar_select %p39, %s40, %s41
      %p45 = pneg %p39
      %p46 = scmp.eq.s32.totalorder %s18, 5
      %p47 = por %p45, %p46
      %p48 = scmp.ne.s32.totalorder %s40, %s43
      %p49 = scmp.eq.s32.totalorder %s18, 0
      %p50 = por %p48, %p49
      %p51 = scmp.ne.s32.totalorder %s40, %s43
      %p52 = scmp.eq.s32.totalorder %s23, 5
      %p53 = por %p51, %p52
      %p54 = scmp.ne.s32.totalorder %s43, %s44
      %p55 = scmp.eq.s32.totalorder %s23, 0
      %p56 = por %p54, %p55
      %p57 = scmp.ne.s32.totalorder %s43, %s44
      %p58 = scmp.eq.s32.totalorder %s24, 5
      %p59 = por %p57, %p58
      %p61 = scmp.ne.s32.totalorder %s44, %s60
      %p62 = scmp.eq.s32.totalorder %s24, 0
      %p63 = por %p61, %p62
      %s64 = ssub.s32 %s26, %s33
      %p65 = scmp.eq.s32.totalorder %s64, 0
      %s67 = sadd.s32 %s66, 1
      %s68 = scalar_select %p65, %s66, %s67
      %p71 = pneg %p65
      %p72 = scmp.eq.s32.totalorder %s18, 5
      %p73 = por %p71, %p72
      %p74 = scmp.ne.s32.totalorder %s66, %s69
      %p75 = scmp.eq.s32.totalorder %s18, 0
      %p76 = por %p74, %p75
      %p77 = scmp.ne.s32.totalorder %s66, %s69
      %p78 = scmp.eq.s32.totalorder %s23, 5
      %p79 = por %p77, %p78
      %p80 = scmp.ne.s32.totalorder %s69, %s70
      %p81 = scmp.eq.s32.totalorder %s23, 0
      %p82 = por %p80, %p81
      %p83 = scmp.ne.s32.totalorder %s69, %s70
      %p84 = scmp.eq.s32.totalorder %s24, 5
      %p85 = por %p83, %p84
      %p87 = scmp.ne.s32.totalorder %s70, %s86
      %p88 = scmp.eq.s32.totalorder %s24, 0
      %p89 = por %p87, %p88
      %s90 = ssub.s32 %s26, %s33
      %p91 = scmp.eq.s32.totalorder %s90, 0
      %s93 = sadd.s32 %s92, 1
      %s94 = scalar_select %p91, %s92, %s93
      %p97 = pneg %p91
      %p98 = scmp.eq.s32.totalorder %s18, 5
      %p99 = por %p97, %p98
      %p100 = scmp.ne.s32.totalorder %s92, %s95
      %p101 = scmp.eq.s32.totalorder %s18, 0
      %p102 = por %p100, %p101
      %p103 = scmp.ne.s32.totalorder %s92, %s95
      %p104 = scmp.eq.s32.totalorder %s23, 5
      %p105 = por %p103, %p104
      %p106 = scmp.ne.s32.totalorder %s95, %s96
      %p107 = scmp.eq.s32.totalorder %s23, 0
      %p108 = por %p106, %p107
      %p109 = scmp.ne.s32.totalorder %s95, %s96
      %p110 = scmp.eq.s32.totalorder %s24, 5
      %p111 = por %p109, %p110
      %p113 = scmp.ne.s32.totalorder %s96, %s112
      %p114 = scmp.eq.s32.totalorder %s24, 0
      %p115 = por %p113, %p114
      %s116 = ssub.s32 %s25, %s37
      %p117 = scmp.eq.s32.totalorder %s116, 0
      %s119 = sadd.s32 %s118, 1
      %s120 = scalar_select %p117, %s118, %s119
      %p123 = pneg %p117
      %p124 = scmp.eq.s32.totalorder %s18, 5
      %p125 = por %p123, %p124
      %p126 = scmp.ne.s32.totalorder %s118, %s121
      %p127 = scmp.eq.s32.totalorder %s18, 0
      %p128 = por %p126, %p127
      %p129 = scmp.ne.s32.totalorder %s118, %s121
      %p130 = scmp.eq.s32.totalorder %s23, 5
      %p131 = por %p129, %p130
      %p132 = scmp.ne.s32.totalorder %s121, %s122
      %p133 = scmp.eq.s32.totalorder %s23, 0
      %p134 = por %p132, %p133
      %p135 = scmp.ne.s32.totalorder %s121, %s122
      %p136 = scmp.eq.s32.totalorder %s24, 5
      %p137 = por %p135, %p136
      %p139 = scmp.ne.s32.totalorder %s122, %s138
      %p140 = scmp.eq.s32.totalorder %s24, 0
      %p141 = por %p139, %p140
      %p142 = scmp.le.s32.totalorder 1, %s18
      %p143 = scmp.lt.s32.totalorder %s18, 7
      %p144 = pnand %p142, %p143
      %p145 = pneg %p144
      // Predicated region
      $region9: #{tpu_custom_call.1} parent=5 // pred_check
        _
      $region10: #{tpu_custom_call.1} parent=5 // pred_check_branch
        %147 = sbr.rel (%p144) target = $region12
      $region11: #{tpu_custom_call.1} parent=5 // pred_region
        %s148 = ssub.s32 %s18, 1
      $region12: #{tpu_custom_call.1} parent=5 // pred_fallthru
        _
      %p149 = scmp.lt.s32.totalorder %s18, 6
      // Predicated region
      $region13: #{tpu_custom_call.1} parent=5 // pred_check
        %p150 = pneg %p149
      $region14: #{tpu_custom_call.1} parent=5 // pred_check_branch
        %152 = sbr.rel (%p150) target = $region16
      $region15: #{tpu_custom_call.1} parent=5 // pred_region
        // Predicated region
        $region17: #{tpu_custom_call.1} parent=15 // pred_check
          %p153 = pneg %p50
        $region18: #{tpu_custom_call.1} parent=15 // pred_check_branch
          %155 = sbr.rel (%p153) target = $region20
        $region19: #{tpu_custom_call.1} parent=15 // pred_region
          %s156 = sand.u32 %s40, 1
          %s157 = scalar_lea.sflag [#allocation4], %s156
          %s158 = sand.u32 %s40, 1
          %s159 = smul.addr %s158, 32
          %s160 = scalar_lea.vmem [#allocation3], %s159
          %s161 = smul.u32 2, %s25
          %163 = vsyncadd %s157, 0
          %s164 = smul.addr %s161, 2
          %s165 = smul.addr %s164, 8
          %s166 = scalar_lea.hbm %s0, %s165
          %s167 = sshll.u32 %s166, 4
          %s168 = int_to_ptr.hbm [resolvable:$true] %s167
          %s169 = sshll.u32 %s160, 4
          %s170 = int_to_ptr.vmem [resolvable:$true] %s169
          %175 = dma.hbm_to_vmem [thread:$0]  %s168, 512, %s170, %s157, 256, 256, 16
        $region20: #{tpu_custom_call.1} parent=15 // pred_fallthru
          _
        // Predicated region
        $region21: #{tpu_custom_call.1} parent=15 // pred_check
          %p176 = pneg %p76
        $region22: #{tpu_custom_call.1} parent=15 // pred_check_branch
          %178 = sbr.rel (%p176) target = $region24
        $region23: #{tpu_custom_call.1} parent=15 // pred_region
          %s179 = sand.u32 %s18, 1
          %s180 = scalar_lea.sflag [#allocation7], %s179
          %s181 = sand.u32 %s66, 1
          %s182 = smul.addr %s181, 512
          %s183 = scalar_lea.vmem [#allocation6], %s182
          %s184 = smul.u32 2, %s26
          %186 = vsyncadd %s180, 0
          %s187 = smul.addr %s184, 8
          %s188 = scalar_lea.hbm %s1, %s187
          %s189 = sshll.u32 %s188, 4
          %s190 = int_to_ptr.hbm [resolvable:$true] %s189
          %s191 = sshll.u32 %s183, 4
          %s192 = int_to_ptr.vmem [resolvable:$true] %s191
          %197 = dma.hbm_to_vmem [thread:$0]  %s190, 8192, %s192, %s180, 768, 256, 16
        $region24: #{tpu_custom_call.1} parent=15 // pred_fallthru
          _
        // Predicated region
        $region25: #{tpu_custom_call.1} parent=15 // pred_check
          %p198 = pneg %p102
        $region26: #{tpu_custom_call.1} parent=15 // pred_check_branch
          %200 = sbr.rel (%p198) target = $region28
        $region27: #{tpu_custom_call.1} parent=15 // pred_region
          %s201 = sand.u32 %s18, 1
          %s202 = scalar_lea.sflag [#allocation7], %s201
          %s203 = sand.u32 %s92, 1
          %s204 = smul.addr %s203, 256
          %s205 = scalar_lea.vmem [#allocation8], %s204
          %s206 = smul.u32 16, %s26
          %208 = vsyncadd %s202, 0
          %s209 = smul.addr %s206, 2
          %s210 = smul.addr %s209, 8
          %s211 = scalar_lea.hbm %s2, %s210
          %s212 = sshll.u32 %s211, 4
          %s213 = int_to_ptr.hbm [resolvable:$true] %s212
          %s214 = sshll.u32 %s205, 4
          %s215 = int_to_ptr.vmem [resolvable:$true] %s214
          %220 = dma.hbm_to_vmem [thread:$0]  %s213, 4096, %s215, %s202, 256, 256, 16
        $region28: #{tpu_custom_call.1} parent=15 // pred_fallthru
          _
      $region16: #{tpu_custom_call.1} parent=5 // pred_fallthru
        _
      %p221 = scmp.le.s32.totalorder 1, %s18
      %p222 = scmp.lt.s32.totalorder %s18, 7
      %p223 = pnand %p221, %p222
      %p224 = pneg %p223
      // Predicated region
      $region29: #{tpu_custom_call.1} parent=5 // pred_check
        _
      $region30: #{tpu_custom_call.1} parent=5 // pred_check_branch
        %226 = sbr.rel (%p223) target = $region32
      $region31: #{tpu_custom_call.1} parent=5 // pred_region
        %s227 = ssub.s32 %s18, 1
        %s228 = sand.u32 %s43, 1
        %s229 = scalar_lea.sflag [#allocation4], %s228
        %s230 = sand.u32 %s43, 1
        %s231 = smul.addr %s230, 32
        %s232 = scalar_lea.vmem [#allocation3], %s231
        // Predicated region
        $region33: #{tpu_custom_call.1} parent=31 // pred_check
          %p233 = pneg %p56
        $region34: #{tpu_custom_call.1} parent=31 // pred_check_branch
          %235 = sbr.rel (%p233) target = $region36
        $region35: #{tpu_custom_call.1} parent=31 // pred_region
          %237 = dma.done %s229, 512
        $region36: #{tpu_custom_call.1} parent=31 // pred_fallthru
          _
        %s238 = sand.u32 %s23, 1
        %s239 = scalar_lea.sflag [#allocation7], %s238
        %s240 = sand.u32 %s69, 1
        %s241 = smul.addr %s240, 512
        %s242 = scalar_lea.vmem [#allocation6], %s241
        // Predicated region
        $region37: #{tpu_custom_call.1} parent=31 // pred_check
          %p243 = pneg %p82
        $region38: #{tpu_custom_call.1} parent=31 // pred_check_branch
          %245 = sbr.rel (%p243) target = $region40
        $region39: #{tpu_custom_call.1} parent=31 // pred_region
          %247 = dma.done %s239, 8192
        $region40: #{tpu_custom_call.1} parent=31 // pred_fallthru
          _
        %s248 = sand.u32 %s23, 1
        %s249 = scalar_lea.sflag [#allocation7], %s248
        %s250 = sand.u32 %s95, 1
        %s251 = smul.addr %s250, 256
        %s252 = scalar_lea.vmem [#allocation8], %s251
        // Predicated region
        $region41: #{tpu_custom_call.1} parent=31 // pred_check
          %p253 = pneg %p108
        $region42: #{tpu_custom_call.1} parent=31 // pred_check_branch
          %255 = sbr.rel (%p253) target = $region44
        $region43: #{tpu_custom_call.1} parent=31 // pred_region
          %257 = dma.done %s249, 4096
        $region44: #{tpu_custom_call.1} parent=31 // pred_fallthru
          _
        %s258 = sand.u32 %s43, 1
        %s259 = scalar_lea.sflag [#allocation4], %s258
        %s260 = sand.u32 %s43, 1
        %s261 = smul.addr %s260, 32
        %s262 = scalar_lea.vmem [#allocation3], %s261
        %p263 = pneg %p56
        %p264 = pneg %p53
        %s265 = sand.u32 %s23, 1
        %s266 = scalar_lea.sflag [#allocation7], %s265
        %s267 = sand.u32 %s69, 1
        %s268 = smul.addr %s267, 512
        %s269 = scalar_lea.vmem [#allocation6], %s268
        %p270 = pneg %p82
        %p271 = pneg %p79
        %s272 = sand.u32 %s23, 1
        %s273 = scalar_lea.sflag [#allocation7], %s272
        %s274 = sand.u32 %s95, 1
        %s275 = smul.addr %s274, 256
        %s276 = scalar_lea.vmem [#allocation8], %s275
        %p277 = pneg %p108
        %p278 = pneg %p105
        %p279 = pneg %p134
        %p280 = pneg %p131
        %s281 = sand.u32 %s121, 1
        %s282 = scalar_lea.sflag [#allocation5], %s281
        %s283 = sand.u32 %s121, 1
        %s284 = smul.addr %s283, 32
        %s285 = scalar_lea.vmem [#allocation9], %s284
        %s286 = smul.u32 2, %s27
        %s287 = smul.u32 2, %s28
        %s288 = smul.u32 16, %s28
        %s289 = smul.u32 2, %s27
        %p290 = scmp.eq.s32.totalorder %s28, 0
        // Predicated region
        $region45: #{tpu_custom_call.1} parent=31 // pred_check
          %p291 = pneg %p290
        $region46: #{tpu_custom_call.1} parent=31 // pred_check_branch
          %293 = sbr.rel (%p291) target = $region48
        $region47: #{tpu_custom_call.1} parent=31 // pred_region
          %294 = vst [vmem:[#allocation2] sm:$0xff] 0.0
          %295 = vst [vmem:[#allocation2 + $0x8] sm:$0xff] 0.0
          %296 = vst [vmem:[#allocation2 + $0x10] sm:$0xff] 0.0
          %297 = vst [vmem:[#allocation2 + $0x18] sm:$0xff] 0.0
        $region48: #{tpu_custom_call.1} parent=31 // pred_fallthru
          _
        %v298 = vld [vmem:[%s232] sm:$0xff]
        %v299 = vld [vmem:[%s232 + $0x8] sm:$0xff]
        %v300 = vld [vmem:[%s232 + $0x10] sm:$0xff]
        %v301 = vld [vmem:[%s232 + $0x18] sm:$0xff]
        %v302 = vld [vmem:[%s242] sm:$0xff]
        %v303 = vld [vmem:[%s242 + $0x8] sm:$0xff]
        %v304 = vld [vmem:[%s242 + $0x10] sm:$0xff]
        %v305 = vld [vmem:[%s242 + $0x18] sm:$0xff]
        %v306 = vld [vmem:[%s242 + $0x20] sm:$0xff]
        %v307 = vld [vmem:[%s242 + $0x28] sm:$0xff]
        %v308 = vld [vmem:[%s242 + $0x30] sm:$0xff]
        %v309 = vld [vmem:[%s242 + $0x38] sm:$0xff]
        %v310 = vld [vmem:[%s242 + $0x40] sm:$0xff]
        %v311 = vld [vmem:[%s242 + $0x48] sm:$0xff]
        %v312 = vld [vmem:[%s242 + $0x50] sm:$0xff]
        %v313 = vld [vmem:[%s242 + $0x58] sm:$0xff]
        %v314 = vld [vmem:[%s242 + $0x60] sm:$0xff]
        %v315 = vld [vmem:[%s242 + $0x68] sm:$0xff]
        %v316 = vld [vmem:[%s242 + $0x70] sm:$0xff]
        %v317 = vld [vmem:[%s242 + $0x78] sm:$0xff]
        %v318 = vld [vmem:[%s242 + $0x80] sm:$0xff]
        %v319 = vld [vmem:[%s242 + $0x88] sm:$0xff]
        %v320 = vld [vmem:[%s242 + $0x90] sm:$0xff]
        %v321 = vld [vmem:[%s242 + $0x98] sm:$0xff]
        %v322 = vld [vmem:[%s242 + $0xa0] sm:$0xff]
        %v323 = vld [vmem:[%s242 + $0xa8] sm:$0xff]
        %v324 = vld [vmem:[%s242 + $0xb0] sm:$0xff]
        %v325 = vld [vmem:[%s242 + $0xb8] sm:$0xff]
        %v326 = vld [vmem:[%s242 + $0xc0] sm:$0xff]
        %v327 = vld [vmem:[%s242 + $0xc8] sm:$0xff]
        %v328 = vld [vmem:[%s242 + $0xd0] sm:$0xff]
        %v329 = vld [vmem:[%s242 + $0xd8] sm:$0xff]
        %v330 = vld [vmem:[%s242 + $0xe0] sm:$0xff]
        %v331 = vld [vmem:[%s242 + $0xe8] sm:$0xff]
        %v332 = vld [vmem:[%s242 + $0xf0] sm:$0xff]
        %v333 = vld [vmem:[%s242 + $0xf8] sm:$0xff]
        %v334 = vld [vmem:[%s242 + $0x100] sm:$0xff]
        %v335 = vld [vmem:[%s242 + $0x108] sm:$0xff]
        %v336 = vld [vmem:[%s242 + $0x110] sm:$0xff]
        %v337 = vld [vmem:[%s242 + $0x118] sm:$0xff]
        %v338 = vld [vmem:[%s242 + $0x120] sm:$0xff]
        %v339 = vld [vmem:[%s242 + $0x128] sm:$0xff]
        %v340 = vld [vmem:[%s242 + $0x130] sm:$0xff]
        %v341 = vld [vmem:[%s242 + $0x138] sm:$0xff]
        %v342 = vld [vmem:[%s242 + $0x140] sm:$0xff]
        %v343 = vld [vmem:[%s242 + $0x148] sm:$0xff]
        %v344 = vld [vmem:[%s242 + $0x150] sm:$0xff]
        %v345 = vld [vmem:[%s242 + $0x158] sm:$0xff]
        %v346 = vld [vmem:[%s242 + $0x160] sm:$0xff]
        %v347 = vld [vmem:[%s242 + $0x168] sm:$0xff]
        %v348 = vld [vmem:[%s242 + $0x170] sm:$0xff]
        %v349 = vld [vmem:[%s242 + $0x178] sm:$0xff]
        %v350 = vld [vmem:[%s242 + $0x180] sm:$0xff]
        %v351 = vld [vmem:[%s242 + $0x188] sm:$0xff]
        %v352 = vld [vmem:[%s242 + $0x190] sm:$0xff]
        %v353 = vld [vmem:[%s242 + $0x198] sm:$0xff]
        %v354 = vld [vmem:[%s242 + $0x1a0] sm:$0xff]
        %v355 = vld [vmem:[%s242 + $0x1a8] sm:$0xff]
        %v356 = vld [vmem:[%s242 + $0x1b0] sm:$0xff]
        %v357 = vld [vmem:[%s242 + $0x1b8] sm:$0xff]
        %v358 = vld [vmem:[%s242 + $0x1c0] sm:$0xff]
        %v359 = vld [vmem:[%s242 + $0x1c8] sm:$0xff]
        %v360 = vld [vmem:[%s242 + $0x1d0] sm:$0xff]
        %v361 = vld [vmem:[%s242 + $0x1d8] sm:$0xff]
        %v362 = vld [vmem:[%s242 + $0x1e0] sm:$0xff]
        %v363 = vld [vmem:[%s242 + $0x1e8] sm:$0xff]
        %v364 = vld [vmem:[%s242 + $0x1f0] sm:$0xff]
        %v365 = vld [vmem:[%s242 + $0x1f8] sm:$0xff]
        %366 = vmatpush.msra.mxu0 %v332
        %367 = vmatpush.msra.mxu0 %v330
        %368 = vmatpush.msra.mxu0 %v328
        %369 = vmatpush.msra.mxu0 %v326
        %370 = vmatpush.msra.mxu0 %v324
        %371 = vmatpush.msra.mxu0 %v322
        %372 = vmatpush.msra.mxu0 %v320
        %373 = vmatpush.msra.mxu0 %v318
        %374 = vmatpush.msra.mxu0 %v316
        %375 = vmatpush.msra.mxu0 %v314
        %376 = vmatpush.msra.mxu0 %v312
        %377 = vmatpush.msra.mxu0 %v310
        %378 = vmatpush.msra.mxu0 %v308
        %379 = vmatpush.msra.mxu0 %v306
        %380 = vmatpush.msra.mxu0 %v304
        %381 = vmatpush.msra.mxu0 %v302
        %382 = vmatmul.f32.gmra.mxu0 %v298
        %v383 = vpop.f32.mrf.mxu0
        %v384 = vadd.f32 0.0, %v383
        %385 = vmatmul.f32.gmra.mxu0 %v300
        %v386 = vpop.f32.mrf.mxu0
        %v387 = vadd.f32 0.0, %v386
        %388 = vdwg.mxu0
        %389 = vmatpush.msra.mxu0 %v364
        %390 = vmatpush.msra.mxu0 %v362
        %391 = vmatpush.msra.mxu0 %v360
        %392 = vmatpush.msra.mxu0 %v358
        %393 = vmatpush.msra.mxu0 %v356
        %394 = vmatpush.msra.mxu0 %v354
        %395 = vmatpush.msra.mxu0 %v352
        %396 = vmatpush.msra.mxu0 %v350
        %397 = vmatpush.msra.mxu0 %v348
        %398 = vmatpush.msra.mxu0 %v346
        %399 = vmatpush.msra.mxu0 %v344
        %400 = vmatpush.msra.mxu0 %v342
        %401 = vmatpush.msra.mxu0 %v340
        %402 = vmatpush.msra.mxu0 %v338
        %403 = vmatpush.msra.mxu0 %v336
        %404 = vmatpush.msra.mxu0 %v334
        %405 = vmatmul.f32.gmra.mxu0 %v299
        %v406 = vpop.f32.mrf.mxu0
        %v407 = vadd.f32 %v384, %v406
        %408 = vmatmul.f32.gmra.mxu0 %v301
        %v409 = vpop.f32.mrf.mxu0
        %v410 = vadd.f32 %v387, %v409
        %411 = vdwg.mxu0
        %412 = vmatpush.msra.mxu0 %v333
        %413 = vmatpush.msra.mxu0 %v331
        %414 = vmatpush.msra.mxu0 %v329
        %415 = vmatpush.msra.mxu0 %v327
        %416 = vmatpush.msra.mxu0 %v325
        %417 = vmatpush.msra.mxu0 %v323
        %418 = vmatpush.msra.mxu0 %v321
        %419 = vmatpush.msra.mxu0 %v319
        %420 = vmatpush.msra.mxu0 %v317
        %421 = vmatpush.msra.mxu0 %v315
        %422 = vmatpush.msra.mxu0 %v313
        %423 = vmatpush.msra.mxu0 %v311
        %424 = vmatpush.msra.mxu0 %v309
        %425 = vmatpush.msra.mxu0 %v307
        %426 = vmatpush.msra.mxu0 %v305
        %427 = vmatpush.msra.mxu0 %v303
        %428 = vmatmul.f32.gmra.mxu0 %v298
        %v429 = vpop.f32.mrf.mxu0
        %v430 = vadd.f32 0.0, %v429
        %431 = vmatmul.f32.gmra.mxu0 %v300
        %v432 = vpop.f32.mrf.mxu0
        %v433 = vadd.f32 0.0, %v432
        %434 = vdwg.mxu0
        %435 = vmatpush.msra.mxu0 %v365
        %436 = vmatpush.msra.mxu0 %v363
        %437 = vmatpush.msra.mxu0 %v361
        %438 = vmatpush.msra.mxu0 %v359
        %439 = vmatpush.msra.mxu0 %v357
        %440 = vmatpush.msra.mxu0 %v355
        %441 = vmatpush.msra.mxu0 %v353
        %442 = vmatpush.msra.mxu0 %v351
        %443 = vmatpush.msra.mxu0 %v349
        %444 = vmatpush.msra.mxu0 %v347
        %445 = vmatpush.msra.mxu0 %v345
        %446 = vmatpush.msra.mxu0 %v343
        %447 = vmatpush.msra.mxu0 %v341
        %448 = vmatpush.msra.mxu0 %v339
        %449 = vmatpush.msra.mxu0 %v337
        %450 = vmatpush.msra.mxu0 %v335
        %451 = vmatmul.f32.gmra.mxu0 %v299
        %v452 = vpop.f32.mrf.mxu0
        %v453 = vadd.f32 %v430, %v452
        %454 = vmatmul.f32.gmra.mxu0 %v301
        %v455 = vpop.f32.mrf.mxu0
        %v456 = vadd.f32 %v433, %v455
        %457 = vdwg.mxu0
        %v458 = vxor.u32 %v407, 2147483648
        %v459 = vxor.u32 %v410, 2147483648
        %v460 = vmul.f32 %v458, 1.442695
        %v461 = vpow.pop %v460
        %v462 = vmul.f32 %v459, 1.442695
        %v463 = vpow.pop %v462
        %v464 = vadd.f32 %v461, 1.0
        %v465 = vadd.f32 %v463, 1.0
        %v466 = vrcp.pop %v464
        %v467 = vmul.f32 %v464, %v466
        %v468 = vsub.f32 1.0, %v467
        %v469 = vmul.f32 %v466, %v468
        %v470 = vadd.f32 %v466, %v469
        %vm471 = vweird.f32 %v464
        %vm472 = vweird.f32 %v466
        %vm473 = vmor %vm471, %vm472
        %v474 = vsel %vm473, %v466, %v470
        %v475 = vand.u32 2147483647, %v464
        %vm476 = vcmp.eq.f32.partialorder %v475, 8.507059e+37
        %v477 = vand.u32 %v464, 2147483648
        %v478 = vor.u32 1.1754944e-38, %v477
        %v479 = vsel %vm476, %v478, %v474
        %v480 = vmul.f32 1.0, %v479
        %v481 = vrcp.pop %v465
        %v482 = vmul.f32 %v465, %v481
        %v483 = vsub.f32 1.0, %v482
        %v484 = vmul.f32 %v481, %v483
        %v485 = vadd.f32 %v481, %v484
        %vm486 = vweird.f32 %v465
        %vm487 = vweird.f32 %v481
        %vm488 = vmor %vm486, %vm487
        %v489 = vsel %vm488, %v481, %v485
        %v490 = vand.u32 2147483647, %v465
        %vm491 = vcmp.eq.f32.partialorder %v490, 8.507059e+37
        %v492 = vand.u32 %v465, 2147483648
        %v493 = vor.u32 1.1754944e-38, %v492
        %v494 = vsel %vm491, %v493, %v489
        %v495 = vmul.f32 1.0, %v494
        %v496 = vmul.f32 %v407, %v480
        %v497 = vmul.f32 %v410, %v495
        %v498 = vmul.f32 %v496, %v453
        %v499 = vmul.f32 %v497, %v456
        %v500 = vld [vmem:[#allocation2] sm:$0xff]
        %v501 = vld [vmem:[#allocation2 + $0x8] sm:$0xff]
        %v502 = vld [vmem:[#allocation2 + $0x10] sm:$0xff]
        %v503 = vld [vmem:[#allocation2 + $0x18] sm:$0xff]
        %v504 = vld [vmem:[%s252] sm:$0xff]
        %v505 = vld [vmem:[%s252 + $0x8] sm:$0xff]
        %v506 = vld [vmem:[%s252 + $0x10] sm:$0xff]
        %v507 = vld [vmem:[%s252 + $0x18] sm:$0xff]
        %v508 = vld [vmem:[%s252 + $0x20] sm:$0xff]
        %v509 = vld [vmem:[%s252 + $0x28] sm:$0xff]
        %v510 = vld [vmem:[%s252 + $0x30] sm:$0xff]
        %v511 = vld [vmem:[%s252 + $0x38] sm:$0xff]
        %v512 = vld [vmem:[%s252 + $0x40] sm:$0xff]
        %v513 = vld [vmem:[%s252 + $0x48] sm:$0xff]
        %v514 = vld [vmem:[%s252 + $0x50] sm:$0xff]
        %v515 = vld [vmem:[%s252 + $0x58] sm:$0xff]
        %v516 = vld [vmem:[%s252 + $0x60] sm:$0xff]
        %v517 = vld [vmem:[%s252 + $0x68] sm:$0xff]
        %v518 = vld [vmem:[%s252 + $0x70] sm:$0xff]
        %v519 = vld [vmem:[%s252 + $0x78] sm:$0xff]
        %v520 = vld [vmem:[%s252 + $0x80] sm:$0xff]
        %v521 = vld [vmem:[%s252 + $0x88] sm:$0xff]
        %v522 = vld [vmem:[%s252 + $0x90] sm:$0xff]
        %v523 = vld [vmem:[%s252 + $0x98] sm:$0xff]
        %v524 = vld [vmem:[%s252 + $0xa0] sm:$0xff]
        %v525 = vld [vmem:[%s252 + $0xa8] sm:$0xff]
        %v526 = vld [vmem:[%s252 + $0xb0] sm:$0xff]
        %v527 = vld [vmem:[%s252 + $0xb8] sm:$0xff]
        %v528 = vld [vmem:[%s252 + $0xc0] sm:$0xff]
        %v529 = vld [vmem:[%s252 + $0xc8] sm:$0xff]
        %v530 = vld [vmem:[%s252 + $0xd0] sm:$0xff]
        %v531 = vld [vmem:[%s252 + $0xd8] sm:$0xff]
        %v532 = vld [vmem:[%s252 + $0xe0] sm:$0xff]
        %v533 = vld [vmem:[%s252 + $0xe8] sm:$0xff]
        %v534 = vld [vmem:[%s252 + $0xf0] sm:$0xff]
        %v535 = vld [vmem:[%s252 + $0xf8] sm:$0xff]
        %536 = vmatpush.msra.mxu0 %v534
        %537 = vmatpush.msra.mxu0 %v532
        %538 = vmatpush.msra.mxu0 %v530
        %539 = vmatpush.msra.mxu0 %v528
        %540 = vmatpush.msra.mxu0 %v526
        %541 = vmatpush.msra.mxu0 %v524
        %542 = vmatpush.msra.mxu0 %v522
        %543 = vmatpush.msra.mxu0 %v520
        %544 = vmatpush.msra.mxu0 %v518
        %545 = vmatpush.msra.mxu0 %v516
        %546 = vmatpush.msra.mxu0 %v514
        %547 = vmatpush.msra.mxu0 %v512
        %548 = vmatpush.msra.mxu0 %v510
        %549 = vmatpush.msra.mxu0 %v508
        %550 = vmatpush.msra.mxu0 %v506
        %551 = vmatpush.msra.mxu0 %v504
        %552 = vmatmul.f32.gmra.mxu0 %v498
        %v553 = vpop.f32.mrf.mxu0
        %v554 = vadd.f32 0.0, %v553
        %555 = vmatmul.f32.gmra.mxu0 %v499
        %v556 = vpop.f32.mrf.mxu0
        %v557 = vadd.f32 0.0, %v556
        %558 = vdwg.mxu0
        %559 = vmatpush.msra.mxu0 %v535
        %560 = vmatpush.msra.mxu0 %v533
        %561 = vmatpush.msra.mxu0 %v531
        %562 = vmatpush.msra.mxu0 %v529
        %563 = vmatpush.msra.mxu0 %v527
        %564 = vmatpush.msra.mxu0 %v525
        %565 = vmatpush.msra.mxu0 %v523
        %566 = vmatpush.msra.mxu0 %v521
        %567 = vmatpush.msra.mxu0 %v519
        %568 = vmatpush.msra.mxu0 %v517
        %569 = vmatpush.msra.mxu0 %v515
        %570 = vmatpush.msra.mxu0 %v513
        %571 = vmatpush.msra.mxu0 %v511
        %572 = vmatpush.msra.mxu0 %v509
        %573 = vmatpush.msra.mxu0 %v507
        %574 = vmatpush.msra.mxu0 %v505
        %575 = vmatmul.f32.gmra.mxu0 %v498
        %v576 = vpop.f32.mrf.mxu0
        %v577 = vadd.f32 0.0, %v576
        %578 = vmatmul.f32.gmra.mxu0 %v499
        %v579 = vpop.f32.mrf.mxu0
        %v580 = vadd.f32 0.0, %v579
        %581 = vdwg.mxu0
        %v582 = vadd.f32 %v500, %v554
        %v583 = vadd.f32 %v501, %v577
        %v584 = vadd.f32 %v502, %v557
        %v585 = vadd.f32 %v503, %v580
        %586 = vst [vmem:[#allocation2] sm:$0xff] %v582
        %587 = vst [vmem:[#allocation2 + $0x8] sm:$0xff] %v583
        %588 = vst [vmem:[#allocation2 + $0x10] sm:$0xff] %v584
        %589 = vst [vmem:[#allocation2 + $0x18] sm:$0xff] %v585
        %p590 = scmp.eq.s32.totalorder %s28, 2
        // Predicated region
        $region49: #{tpu_custom_call.1} parent=31 // pred_check
          %p591 = pneg %p590
        $region50: #{tpu_custom_call.1} parent=31 // pred_check_branch
          %593 = sbr.rel (%p591) target = $region52
        $region51: #{tpu_custom_call.1} parent=31 // pred_region
          %v594 = vld [vmem:[#allocation2] sm:$0xff]
          %v595 = vld [vmem:[#allocation2 + $0x8] sm:$0xff]
          %v596 = vld [vmem:[#allocation2 + $0x10] sm:$0xff]
          %v597 = vld [vmem:[#allocation2 + $0x18] sm:$0xff]
          %598 = vst [vmem:[%s285] sm:$0xff] %v594
          %599 = vst [vmem:[%s285 + $0x8] sm:$0xff] %v595
          %600 = vst [vmem:[%s285 + $0x10] sm:$0xff] %v596
          %601 = vst [vmem:[%s285 + $0x18] sm:$0xff] %v597
        $region52: #{tpu_custom_call.1} parent=31 // pred_fallthru
          _
        %s602 = sand.u32 %s121, 1
        %s603 = scalar_lea.sflag [#allocation5], %s602
        %s604 = sand.u32 %s121, 1
        %s605 = smul.addr %s604, 32
        %s606 = scalar_lea.vmem [#allocation9], %s605
        // Predicated region
        $region53: #{tpu_custom_call.1} parent=31 // pred_check
          %p607 = pneg %p131
        $region54: #{tpu_custom_call.1} parent=31 // pred_check_branch
          %609 = sbr.rel (%p607) target = $region56
        $region55: #{tpu_custom_call.1} parent=31 // pred_region
          %s610 = smul.u32 2, %s27
          %612 = vsyncadd %s603, 0
          %s613 = smul.addr %s610, 2
          %s614 = smul.addr %s613, 8
          %s615 = scalar_lea.hbm %s3, %s614
          %s616 = sshll.u32 %s606, 4
          %s617 = int_to_ptr.vmem [resolvable:$true] %s616
          %s618 = sshll.u32 %s615, 4
          %s619 = int_to_ptr.hbm [resolvable:$true] %s618
          %624 = dma.vmem_to_hbm [thread:$0]  %s617, 512, %s619, %s603, 256, 256, 16
        $region56: #{tpu_custom_call.1} parent=31 // pred_fallthru
          _
      $region32: #{tpu_custom_call.1} parent=5 // pred_fallthru
        _
      %p625 = scmp.le.s32.totalorder 2, %s18
      // Predicated region
      $region57: #{tpu_custom_call.1} parent=5 // pred_check
        %p626 = pneg %p625
      $region58: #{tpu_custom_call.1} parent=5 // pred_check_branch
        %628 = sbr.rel (%p626) target = $region60
      $region59: #{tpu_custom_call.1} parent=5 // pred_region
        %s629 = ssub.s32 %s18, 2
        // Predicated region
        $region61: #{tpu_custom_call.1} parent=59 // pred_check
          %p630 = pneg %p137
        $region62: #{tpu_custom_call.1} parent=59 // pred_check_branch
          %632 = sbr.rel (%p630) target = $region64
        $region63: #{tpu_custom_call.1} parent=59 // pred_region
          %s633 = sand.u32 %s122, 1
          %s634 = scalar_lea.sflag [#allocation5], %s633
          %s635 = sand.u32 %s122, 1
          %s636 = smul.addr %s635, 32
          %s637 = scalar_lea.vmem [#allocation9], %s636
          %639 = dma.done %s634, 512
        $region64: #{tpu_custom_call.1} parent=59 // pred_fallthru
          _
      $region60: #{tpu_custom_call.1} parent=5 // pred_fallthru
        _
    $region6: #{tpu_custom_call.1} parent=1 // loop_footer
      %s22 = sadd.s32 1, %s18
    $region7: #{tpu_custom_call.1} parent=1 // loop_footer_branch
      %17 = sbr.rel target = $region3
    $region8: #{tpu_custom_call.1} parent=1 // loop_exit
      _
    %640 = vsyncpa [#allocation4], 1
    %s641 = scalar_lea.sflag [#allocation4], 1
    %642 = vsyncpa %s641, 1
    %643 = vsyncpa [#allocation7], 1
    %s644 = scalar_lea.sflag [#allocation7], 1
    %645 = vsyncpa %s644, 1
    %646 = vsyncpa [#allocation5], 1
    %s647 = scalar_lea.sflag [#allocation5], 1
    %648 = vsyncpa %s647, 1

</llo_original>
